<compile_context>
chip_gen: v7x
topology: tpu7x:2x2x1
jax: 0.10.0
libtpu: 0.0.40
codegen_flags: <defaults>
</compile_context>

<pallas_src>
import functools

import jax
import jax.numpy as jnp
from jax.experimental import pallas as pl
from jax.experimental.pallas import tpu as pltpu


def _round_up(x: int, m: int) -> int:
    return ((x + m - 1) // m) * m


def _cdiv(a: int, b: int) -> int:
    return -(-a // b)


def _vmem_budget_bytes() -> int:
    """~80% of per-core VMEM; conservative 64 MiB (v7x) fallback if the query fails."""
    cap = None
    try:
        info = pltpu.get_tpu_info()
        cap = getattr(info, "vmem_capacity_bytes", None)
    except Exception:
        cap = None
    if not cap:
        cap = 64 * 1024 * 1024
    return int(0.8 * cap)


def mlp_kernel(x_ref, w1_ref, b1_ref, w2_ref, b2_ref, o_ref, acc_ref):
    hi = pl.program_id(1)

    @pl.when(hi == 0)
    def _init():
        acc_ref[...] = jnp.zeros_like(acc_ref)

    # In-kernel cast of the activation tile to the compute dtype (no wrapper HBM pass).
    x = x_ref[...].astype(w1_ref.dtype)

    # fc1 (+bias) with f32 MXU accumulation, then leaky_relu (slope 0.01) as one max.
    h = jnp.dot(x, w1_ref[...], preferred_element_type=jnp.float32) + b1_ref[...]
    h = jnp.maximum(h, 0.01 * h)

    # fc2 partial product over this hidden tile, accumulated in f32.
    acc_ref[...] += jnp.dot(h.astype(w2_ref.dtype), w2_ref[...],
                            preferred_element_type=jnp.float32)

    @pl.when(hi == pl.num_programs(1) - 1)
    def _finalize():
        o_ref[...] = (acc_ref[...] + b2_ref[...]).astype(o_ref.dtype)


def _mlp_forward(x, w1p, b1p, w2p, b2p, *, tb_plan, th, out_f, vmem_limit):
    B, in_f = x.shape
    in_fp, hid_p = w1p.shape
    out_p = w2p.shape[1]
    num_h = hid_p // th
    out_dtype = x.dtype
    SUB = 8

    # Batch tile: as large as planned, shrunk to minimize zero-row padding, and split
    # in two when a single large tile would leave one v7x TensorCore idle.
    num_bt = max(1, _cdiv(B, tb_plan))
    tb = min(tb_plan, _round_up(_cdiv(B, num_bt), SUB))
    if num_bt == 1 and tb >= 256:
        num_bt = 2
        tb = _round_up(_cdiv(B, 2), SUB)
    B_p = _round_up(B, tb)

    xp = x
    if B_p != B or in_fp != in_f:
        xp = jnp.pad(x, ((0, B_p - B), (0, in_fp - in_f)))

    # Resident (constant index_map) operands get a single VMEM buffer; streamed ones
    # keep the default double buffer.
    def _wspec(shape, imap):
        if num_h == 1:
            return pl.BlockSpec(shape, imap, pipeline_mode=pl.Buffered(1))
        return pl.BlockSpec(shape, imap)

    grid = (B_p // tb, num_h)

    out_padded = pl.pallas_call(
        mlp_kernel,
        out_shape=jax.ShapeDtypeStruct((B_p, out_p), out_dtype),
        grid_spec=pltpu.PrefetchScalarGridSpec(
            num_scalar_prefetch=0,
            grid=grid,
            in_specs=[
                pl.BlockSpec((tb, in_fp), lambda bi, hi: (bi, 0)),   # x tile (per bi)
                _wspec((in_fp, th), lambda bi, hi: (0, hi)),         # w1 block
                _wspec((1, th), lambda bi, hi: (0, hi)),             # b1 block
                _wspec((th, out_p), lambda bi, hi: (hi, 0)),         # w2 block
                pl.BlockSpec((1, out_p), lambda bi, hi: (0, 0),      # b2 (resident)
                             pipeline_mode=pl.Buffered(1)),
            ],
            out_specs=pl.BlockSpec((tb, out_p), lambda bi, hi: (bi, 0)),
            scratch_shapes=[pltpu.VMEM((tb, out_p), jnp.float32)],
        ),
        compiler_params=pltpu.CompilerParams(
            dimension_semantics=("parallel", "arbitrary"),  # megacore on batch axis
            vmem_limit_bytes=vmem_limit,
        ),
    )(xp, w1p, b1p, w2p, b2p)

    return out_padded[:B, :out_f]


def make_mlp(w1, b1, w2, b2, *, block_b=512, compute_dtype=None):
    """Pad/cast parameters ONCE, plan tiling from the VMEM budget, return jitted fwd."""
    in_f, hid = w1.shape
    assert w2.shape[0] == hid
    out_f = w2.shape[1]

    if compute_dtype is None:
        compute_dtype = w1.dtype
    compute_dtype = jnp.dtype(compute_dtype)
    csz = compute_dtype.itemsize

    LANE = 128
    SUB = 8
    in_fp = _round_up(in_f, LANE)
    out_p = _round_up(out_f, LANE)
    hid_p0 = _round_up(hid, LANE)

    budget = _vmem_budget_bytes()
    tb_plan = max(SUB, _round_up(min(block_b, 4096), SUB))

    def footprint(tb, th):
        nb = 1 if th >= hid_p0 else 2            # resident -> single buffer
        f = 0
        f += 2 * tb * in_fp * 4                  # x tiles (double buffered, f32 storage)
        f += 2 * tb * out_p * 4                  # out tiles (double buffered)
        f += nb * (in_fp * th * csz + th * 4)    # w1 + b1 blocks
        f += nb * th * out_p * csz + out_p * 4   # w2 blocks + b2
        f += tb * out_p * 4                      # f32 accumulator scratch
        f += tb * in_fp * csz                    # in-kernel x cast temporary
        f += tb * th * (4 + csz)                 # f32 h + compute-dtype h temporaries
        return int(1.25 * f)                     # headroom for compiler scratch

    tb, th = tb_plan, hid_p0
    # Shrink the batch tile first (keeps weights resident), then tile the hidden dim.
    while footprint(tb, th) > budget and tb > 128:
        tb = max(SUB, _round_up(tb // 2, SUB))
    while footprint(tb, th) > budget and th > LANE:
        th = _round_up(_cdiv(th, 2), LANE)
    # (If it still does not fit we proceed best-effort.)

    hid_p = _round_up(hid, th)

    def pad2(a, rows, cols):
        a2 = a if a.ndim == 2 else a.reshape(1, -1)
        return jnp.pad(a2, ((0, rows - a2.shape[0]), (0, cols - a2.shape[1])))

    # One-time pad + compute-dtype cast (hoisted out of the per-call path).
    w1p = pad2(w1, in_fp, hid_p).astype(compute_dtype)
    b1p = pad2(b1, 1, hid_p).astype(jnp.float32)
    w2p = pad2(w2, hid_p, out_p).astype(compute_dtype)
    b2p = pad2(b2, 1, out_p).astype(jnp.float32)

    fwd = jax.jit(functools.partial(_mlp_forward, tb_plan=tb, th=th,
                                    out_f=out_f, vmem_limit=budget))

    def forward(x):
        return fwd(x, w1p, b1p, w2p, b2p)

    return forward


def init_params(key, in_features, out_features, dtype=jnp.float32):
    """Deterministic init matching nn.Linear shapes (weights stored transposed)."""
    hid = in_features // 2
    k1, k2, k3, k4 = jax.random.split(key, 4)
    lim1 = 1.0 / (in_features ** 0.5)
    lim2 = 1.0 / (hid ** 0.5)
    w1 = jax.random.uniform(k1, (in_features, hid), dtype, -lim1, lim1)
    b1 = jax.random.uniform(k2, (1, hid), dtype, -lim1, lim1)
    w2 = jax.random.uniform(k3, (hid, out_features), dtype, -lim2, lim2)
    b2 = jax.random.uniform(k4, (1, out_features), dtype, -lim2, lim2)
    return w1, b1, w2, b2


def mlp_reference(x, w1, b1, w2, b2):
    h = x @ w1 + b1
    h = jnp.where(h > 0, h, 0.01 * h)
    return h @ w2 + b2


if __name__ == "__main__":
    B = 8
    in_features = 64
    out_features = 32

    key = jax.random.PRNGKey(0)
    kx, kp = jax.random.split(key)
    x = jax.random.normal(kx, (B, in_features), jnp.float32)
    w1, b1, w2, b2 = init_params(kp, in_features, out_features)

    y_ref = mlp_reference(x, w1, b1, w2, b2)

    # f32 path — exact match vs reference.
    mlp_f32 = make_mlp(w1, b1, w2, b2)
    y = mlp_f32(x)
    jax.block_until_ready(y)
    assert y.shape == (B, out_features)
    assert jnp.allclose(y, y_ref, atol=1e-5, rtol=1e-5), "f32 mismatch vs reference"

    # bf16-operand path (v6e/v7x MXU peak) — f32 accumulation, loose tolerance.
    mlp_bf16 = make_mlp(w1, b1, w2, b2, compute_dtype=jnp.bfloat16)
    y_bf16 = mlp_bf16(x)
    jax.block_until_ready(y_bf16)
    assert y_bf16.shape == (B, out_features)
    assert jnp.allclose(y_bf16, y_ref, atol=5e-2, rtol=5e-2), "bf16 mismatch vs reference"

    print("KERNEL_OK")
</pallas_src>

<mosaic_0001>
module attributes {stable_mosaic.version = 11 : i64} {
  func.func @mlp_kernel(%arg0: i32, %arg1: i32, %arg2: memref<8x128xf32, #tpu.memory_space<vmem>>, %arg3: memref<128x128xf32, #tpu.memory_space<vmem>>, %arg4: memref<1x128xf32, #tpu.memory_space<vmem>>, %arg5: memref<128x128xf32, #tpu.memory_space<vmem>>, %arg6: memref<1x128xf32, #tpu.memory_space<vmem>>, %arg7: memref<8x128xf32, #tpu.memory_space<vmem>>, %arg8: memref<8x128xf32, #tpu.memory_space<vmem>>) attributes {dimension_semantics = [#tpu.dimension_semantics<parallel>, #tpu.dimension_semantics<arbitrary>], iteration_bounds = array<i64: 1, 1>, scalar_prefetch = 0 : i64, scratch_operands = 1 : i64, tpu.core_type = #tpu.core_type<tc>, window_params = [{transform_indices = @transform_0, window_bounds = array<i64: 8, 128>}, {pipeline_mode = #tpu.pipeline_mode<synchronous>, transform_indices = @transform_1, window_bounds = array<i64: 128, 128>}, {pipeline_mode = #tpu.pipeline_mode<synchronous>, transform_indices = @transform_2, window_bounds = array<i64: 1, 128>}, {pipeline_mode = #tpu.pipeline_mode<synchronous>, transform_indices = @transform_3, window_bounds = array<i64: 128, 128>}, {pipeline_mode = #tpu.pipeline_mode<synchronous>, transform_indices = @transform_4, window_bounds = array<i64: 1, 128>}, {transform_indices = @transform_5, window_bounds = array<i64: 8, 128>}]} {
    %c0_i32 = arith.constant 0 : i32
    %0 = arith.cmpi eq, %arg1, %c0_i32 : i32
    %1 = arith.extui %0 : i1 to i32
    %c0_i32_0 = arith.constant 0 : i32
    %2 = arith.cmpi ne, %1, %c0_i32_0 : i32
    scf.if %2 {
      %cst_16 = arith.constant 0.000000e+00 : f32
      %20 = vector.broadcast %cst_16 : f32 to vector<8x128xf32>
      %c0_17 = arith.constant 0 : index
      %c0_18 = arith.constant 0 : index
      %21 = vector.load %arg8[%c0_17, %c0_18] : memref<8x128xf32, #tpu.memory_space<vmem>>, vector<8x128xf32>
      tpu.vector_store %arg8[%c0_17, %c0_18], %20 {strides = array<i32>} : memref<8x128xf32, #tpu.memory_space<vmem>>, vector<8x128xf32>,
    } else {
    }
    %c0 = arith.constant 0 : index
    %c0_1 = arith.constant 0 : index
    %3 = vector.load %arg2[%c0, %c0_1] : memref<8x128xf32, #tpu.memory_space<vmem>>, vector<8x128xf32>
    %c0_2 = arith.constant 0 : index
    %c0_3 = arith.constant 0 : index
    %4 = vector.load %arg3[%c0_2, %c0_3] : memref<128x128xf32, #tpu.memory_space<vmem>>, vector<128x128xf32>
    %cst = arith.constant dense<0.000000e+00> : vector<8x128xf32>
    %5 = tpu.matmul %3, %4, %cst {dimension_numbers = #tpu.dot_dimension_numbers<[1], [0], [0], [1], [0, 0, 1, 1], [], []>} : vector<8x128xf32>, vector<128x128xf32>, vector<8x128xf32> -> vector<8x128xf32>
    %c0_4 = arith.constant 0 : index
    %c0_5 = arith.constant 0 : index
    %6 = vector.load %arg4[%c0_4, %c0_5] : memref<1x128xf32, #tpu.memory_space<vmem>>, vector<1x128xf32>
    %7 = vector.broadcast %6 : vector<1x128xf32> to vector<8x128xf32>
    %8 = arith.addf %5, %7 : vector<8x128xf32>
    %cst_6 = arith.constant 0.00999999977 : f32
    %9 = vector.broadcast %cst_6 : f32 to vector<8x128xf32>
    %10 = arith.mulf %9, %8 : vector<8x128xf32>
    %11 = arith.maximumf %8, %10 : vector<8x128xf32>
    %c0_7 = arith.constant 0 : index
    %c0_8 = arith.constant 0 : index
    %12 = vector.load %arg8[%c0_7, %c0_8] : memref<8x128xf32, #tpu.memory_space<vmem>>, vector<8x128xf32>
    %c0_9 = arith.constant 0 : index
    %c0_10 = arith.constant 0 : index
    %13 = vector.load %arg5[%c0_9, %c0_10] : memref<128x128xf32, #tpu.memory_space<vmem>>, vector<128x128xf32>
    %cst_11 = arith.constant dense<0.000000e+00> : vector<8x128xf32>
    %14 = tpu.matmul %11, %13, %cst_11 {dimension_numbers = #tpu.dot_dimension_numbers<[1], [0], [0], [1], [0, 0, 1, 1], [], []>} : vector<8x128xf32>, vector<128x128xf32>, vector<8x128xf32> -> vector<8x128xf32>
    %15 = arith.addf %12, %14 : vector<8x128xf32>
    %c0_12 = arith.constant 0 : index
    %c0_13 = arith.constant 0 : index
    %16 = vector.load %arg8[%c0_12, %c0_13] : memref<8x128xf32, #tpu.memory_space<vmem>>, vector<8x128xf32>
    tpu.vector_store %arg8[%c0_12, %c0_13], %15 {strides = array<i32>} : memref<8x128xf32, #tpu.memory_space<vmem>>, vector<8x128xf32>,
    %c0_i32_14 = arith.constant 0 : i32
    %17 = arith.cmpi eq, %arg1, %c0_i32_14 : i32
    %18 = arith.extui %17 : i1 to i32
    %c0_i32_15 = arith.constant 0 : i32
    %19 = arith.cmpi ne, %18, %c0_i32_15 : i32
    scf.if %19 {
      %c0_16 = arith.constant 0 : index
      %c0_17 = arith.constant 0 : index
      %20 = vector.load %arg8[%c0_16, %c0_17] : memref<8x128xf32, #tpu.memory_space<vmem>>, vector<8x128xf32>
      %c0_18 = arith.constant 0 : index
      %c0_19 = arith.constant 0 : index
      %21 = vector.load %arg6[%c0_18, %c0_19] : memref<1x128xf32, #tpu.memory_space<vmem>>, vector<1x128xf32>
      %22 = vector.broadcast %21 : vector<1x128xf32> to vector<8x128xf32>
      %23 = arith.addf %20, %22 : vector<8x128xf32>
      %c0_20 = arith.constant 0 : index
      %c0_21 = arith.constant 0 : index
      %24 = vector.load %arg7[%c0_20, %c0_21] : memref<8x128xf32, #tpu.memory_space<vmem>>, vector<8x128xf32>
      tpu.vector_store %arg7[%c0_20, %c0_21], %23 {strides = array<i32>} : memref<8x128xf32, #tpu.memory_space<vmem>>, vector<8x128xf32>,
    } else {
    }
    return
  }
  func.func @transform_0(%arg0: i32, %arg1: i32) -> (i32, i32) {
    %c0_i32 = arith.constant 0 : i32
    %c0_i32_0 = arith.constant 0 : i32
    return %arg0, %c0_i32 : i32, i32
  }
  func.func @transform_1(%arg0: i32, %arg1: i32) -> (i32, i32) {
    %c0_i32 = arith.constant 0 : i32
    %c0_i32_0 = arith.constant 0 : i32
    return %c0_i32, %arg1 : i32, i32
  }
  func.func @transform_2(%arg0: i32, %arg1: i32) -> (i32, i32) {
    %c0_i32 = arith.constant 0 : i32
    %c0_i32_0 = arith.constant 0 : i32
    return %c0_i32, %arg1 : i32, i32
  }
  func.func @transform_3(%arg0: i32, %arg1: i32) -> (i32, i32) {
    %c0_i32 = arith.constant 0 : i32
    %c0_i32_0 = arith.constant 0 : i32
    return %arg1, %c0_i32 : i32, i32
  }
  func.func @transform_4(%arg0: i32, %arg1: i32) -> (i32, i32) {
    %c0_i32 = arith.constant 0 : i32
    %c0_i32_0 = arith.constant 0 : i32
    %c0_i32_1 = arith.constant 0 : i32
    return %c0_i32, %c0_i32_0 : i32, i32
  }
  func.func @transform_5(%arg0: i32, %arg1: i32) -> (i32, i32) {
    %c0_i32 = arith.constant 0 : i32
    %c0_i32_0 = arith.constant 0 : i32
    return %arg0, %c0_i32 : i32, i32
  }
}

</mosaic_0001>

<llo_original>
// kernel: _mlp_forward.1
$region0: #{_mlp_forward.1}
  #allocation0 [shape = 'u32[]', space=smem, size = 0x4, offset = 0x4, fixed_abs, tag = 'smem constant byte address 0x4 - core index']
  #allocation1 [shape = 'u32[144,128]{1,0:T(1,128)}', space=vmem, size = 0x12000, scoped, tag = 'internal scratch']
  #allocation2 [shape = 'f32[8,128]{1,0:T(8,128)}', space=vmem, size = 0x1000, scoped, tag = 'scratch operand']
  %s0 = inlined_call_operand.vmem [shape: f32[8,128], index: 0, kind: input, shape index: {}]
  %s1 = inlined_call_operand.hbm [shape: f32[128,128], index: 1, kind: input, shape index: {}]
  %s2 = inlined_call_operand.vmem [shape: f32[1,128], index: 2, kind: input, shape index: {}]
  %s3 = inlined_call_operand.hbm [shape: f32[128,128], index: 3, kind: input, shape index: {}]
  %s4 = inlined_call_operand.vmem [shape: f32[1,128], index: 4, kind: input, shape index: {}]
  %s5 = inlined_call_operand.hbm [shape: f32[8,128], index: 5, kind: output, shape index: {}]
  %s6 = sld [smem:[#allocation0]]
  $region46: #{_mlp_forward.1} parent=0
    _
  %s8 = ssub.s32 1, %s6
  %s9 = scalar_select 0, %s8, %s6
  $region1: #{_mlp_forward.1} parent=0
    #allocation3 [shape = 'u8[65536]{0}', space=vmem, size = 0x10000, scoped, tag = 'input window, operand 1, single buffered']
    #allocation4 [shape = 's32[1]{0}', space=sflag, size = 0x4, scoped, tag = 'scoped memory for _mlp_forward.1']
    #allocation5 [shape = 's32[1]{0}', space=sflag, size = 0x4, scoped, tag = 'scoped memory for _mlp_forward.1']
    #allocation6 [shape = 'u8[65536]{0}', space=vmem, size = 0x10000, scoped, tag = 'input window, operand 3, single buffered']
    #allocation7 [shape = 's32[1]{0}', space=sflag, size = 0x4, scoped, tag = 'scoped memory for _mlp_forward.1']
    #allocation8 [shape = 'u8[4096]{0}', space=vmem, size = 0x1000, scoped, tag = 'output window, operand 0, single buffered']
    %10 = vsyncpa [#allocation4], 0
    %11 = vsyncpa [#allocation7], 0
    %12 = vsyncpa [#allocation5], 0
    // Predicated region
    $region2: #{_mlp_forward.1} parent=1 // pred_check
      _
    $region3: #{_mlp_forward.1} parent=1 // pred_check_branch
      %14 = sbr.rel (0) target = $region5
    $region4: #{_mlp_forward.1} parent=1 // pred_region
      _
    $region5: #{_mlp_forward.1} parent=1 // pred_fallthru
      _
    // Predicated region
    $region6: #{_mlp_forward.1} parent=1 // pred_check
      _
    $region7: #{_mlp_forward.1} parent=1 // pred_check_branch
      %16 = sbr.rel (0) target = $region9
    $region8: #{_mlp_forward.1} parent=1 // pred_region
      %s18 = ssub.s32 2048, 2048
      %19 = vsyncadd [#allocation4], %s18
      %s20 = sshll.u32 [#allocation3], 4
      %s21 = int_to_ptr.vmem [resolvable:$true] %s20
      %26 = dma.hbm_to_vmem [thread:$0]  %s1, 2048, %s21, [#allocation4], 128, 128, 8
    $region9: #{_mlp_forward.1} parent=1 // pred_fallthru
      _
    // Predicated region
    $region10: #{_mlp_forward.1} parent=1 // pred_check
      _
    $region11: #{_mlp_forward.1} parent=1 // pred_check_branch
      %28 = sbr.rel (0) target = $region13
    $region12: #{_mlp_forward.1} parent=1 // pred_region
      _
    $region13: #{_mlp_forward.1} parent=1 // pred_fallthru
      _
    // Predicated region
    $region14: #{_mlp_forward.1} parent=1 // pred_check
      _
    $region15: #{_mlp_forward.1} parent=1 // pred_check_branch
      %30 = sbr.rel (0) target = $region17
    $region16: #{_mlp_forward.1} parent=1 // pred_region
      %s32 = ssub.s32 2048, 2048
      %33 = vsyncadd [#allocation7], %s32
      %s34 = sshll.u32 [#allocation6], 4
      %s35 = int_to_ptr.vmem [resolvable:$true] %s34
      %40 = dma.hbm_to_vmem [thread:$0]  %s3, 2048, %s35, [#allocation7], 128, 128, 8
    $region17: #{_mlp_forward.1} parent=1 // pred_fallthru
      _
    // Predicated region
    $region18: #{_mlp_forward.1} parent=1 // pred_check
      _
    $region19: #{_mlp_forward.1} parent=1 // pred_check_branch
      %42 = sbr.rel (0) target = $region21
    $region20: #{_mlp_forward.1} parent=1 // pred_region
      _
    $region21: #{_mlp_forward.1} parent=1 // pred_fallthru
      _
    // Predicated region
    $region22: #{_mlp_forward.1} parent=1 // pred_check
      _
    $region23: #{_mlp_forward.1} parent=1 // pred_check_branch
      %44 = sbr.rel (0) target = $region25
    $region24: #{_mlp_forward.1} parent=1 // pred_region
      %45 = dma.done [#allocation4], 2048
    $region25: #{_mlp_forward.1} parent=1 // pred_fallthru
      _
    // Predicated region
    $region26: #{_mlp_forward.1} parent=1 // pred_check
      _
    $region27: #{_mlp_forward.1} parent=1 // pred_check_branch
      %47 = sbr.rel (0) target = $region29
    $region28: #{_mlp_forward.1} parent=1 // pred_region
      %48 = dma.done [#allocation7], 2048
    $region29: #{_mlp_forward.1} parent=1 // pred_fallthru
      _
    %p49 = scmp.eq.s32.totalorder 0, 0
    // Predicated region
    $region30: #{_mlp_forward.1} parent=1 // pred_check
      %p50 = pneg %p49
    $region31: #{_mlp_forward.1} parent=1 // pred_check_branch
      %52 = sbr.rel (%p50) target = $region33
    $region32: #{_mlp_forward.1} parent=1 // pred_region
      %53 = vst [vmem:[#allocation2] sm:$0xff] 0.0
    $region33: #{_mlp_forward.1} parent=1 // pred_fallthru
      _
    %v54 = vld [vmem:[%s0] sm:$0xff]
    %v55 = vld [vmem:[#allocation3] sm:$0xff]
    %v56 = vld [vmem:[#allocation3 + $0x8] sm:$0xff]
    %v57 = vld [vmem:[#allocation3 + $0x10] sm:$0xff]
    %v58 = vld [vmem:[#allocation3 + $0x18] sm:$0xff]
    %v59 = vld [vmem:[#allocation3 + $0x20] sm:$0xff]
    %v60 = vld [vmem:[#allocation3 + $0x28] sm:$0xff]
    %v61 = vld [vmem:[#allocation3 + $0x30] sm:$0xff]
    %v62 = vld [vmem:[#allocation3 + $0x38] sm:$0xff]
    %v63 = vld [vmem:[#allocation3 + $0x40] sm:$0xff]
    %v64 = vld [vmem:[#allocation3 + $0x48] sm:$0xff]
    %v65 = vld [vmem:[#allocation3 + $0x50] sm:$0xff]
    %v66 = vld [vmem:[#allocation3 + $0x58] sm:$0xff]
    %v67 = vld [vmem:[#allocation3 + $0x60] sm:$0xff]
    %v68 = vld [vmem:[#allocation3 + $0x68] sm:$0xff]
    %v69 = vld [vmem:[#allocation3 + $0x70] sm:$0xff]
    %v70 = vld [vmem:[#allocation3 + $0x78] sm:$0xff]
    %v71 = vld [vmem:[%s2] sm:$0x1]
    %v73 = vlaneseq
    %v74 = vshrl.u32 %v73, 7
    %v75 = vsub.s32 0, %v74
    %v76 = vrot.slane %v71, %v75
    %78 = vmatprep.subr.mxu0 0.0
    %79 = vmatpush1.msra.mxu0 %v55
    %80 = vmatprep.subr.mxu0 0.0
    %81 = vmatpush1.msra.mxu0 %v56
    %82 = vmatprep.subr.mxu0 0.0
    %83 = vmatpush1.msra.mxu0 %v57
    %84 = vmatprep.subr.mxu0 0.0
    %85 = vmatpush1.msra.mxu0 %v58
    %86 = vmatprep.subr.mxu0 0.0
    %87 = vmatpush1.msra.mxu0 %v59
    %88 = vmatprep.subr.mxu0 0.0
    %89 = vmatpush1.msra.mxu0 %v60
    %90 = vmatprep.subr.mxu0 0.0
    %91 = vmatpush1.msra.mxu0 %v61
    %92 = vmatprep.subr.mxu0 0.0
    %93 = vmatpush1.msra.mxu0 %v62
    %94 = vmatprep.subr.mxu0 0.0
    %95 = vmatpush1.msra.mxu0 %v63
    %96 = vmatprep.subr.mxu0 0.0
    %97 = vmatpush1.msra.mxu0 %v64
    %98 = vmatprep.subr.mxu0 0.0
    %99 = vmatpush1.msra.mxu0 %v65
    %100 = vmatprep.subr.mxu0 0.0
    %101 = vmatpush1.msra.mxu0 %v66
    %102 = vmatprep.subr.mxu0 0.0
    %103 = vmatpush1.msra.mxu0 %v67
    %104 = vmatprep.subr.mxu0 0.0
    %105 = vmatpush1.msra.mxu0 %v68
    %106 = vmatprep.subr.mxu0 0.0
    %107 = vmatpush1.msra.mxu0 %v69
    %108 = vmatprep.subr.mxu0 0.0
    %109 = vmatpush1.msra.mxu0 %v70
    %110 = vmatprep.subr.mxu0 0.0
    %111 = vmatpush1.msra.mxu0 0.0
    %112 = vmatprep.subr.mxu0 0.0
    %113 = vmatpush1.msra.mxu0 0.0
    %114 = vmatprep.subr.mxu0 0.0
    %115 = vmatpush1.msra.mxu0 0.0
    %116 = vmatprep.subr.mxu0 0.0
    %117 = vmatpush1.msra.mxu0 0.0
    %118 = vmatprep.subr.mxu0 0.0
    %119 = vmatpush1.msra.mxu0 0.0
    %120 = vmatprep.subr.mxu0 0.0
    %121 = vmatpush1.msra.mxu0 0.0
    %122 = vmatprep.subr.mxu0 0.0
    %123 = vmatpush1.msra.mxu0 0.0
    %124 = vmatprep.subr.mxu0 0.0
    %125 = vmatpush1.msra.mxu0 0.0
    %126 = vmatprep.subr.mxu0 0.0
    %127 = vmatpush1.msra.mxu0 0.0
    %128 = vmatprep.subr.mxu0 0.0
    %129 = vmatpush1.msra.mxu0 0.0
    %130 = vmatprep.subr.mxu0 0.0
    %131 = vmatpush1.msra.mxu0 0.0
    %132 = vmatprep.subr.mxu0 0.0
    %133 = vmatpush1.msra.mxu0 0.0
    %134 = vmatprep.subr.mxu0 0.0
    %135 = vmatpush1.msra.mxu0 0.0
    %136 = vmatprep.subr.mxu0 0.0
    %137 = vmatpush1.msra.mxu0 0.0
    %138 = vmatprep.subr.mxu0 0.0
    %139 = vmatpush1.msra.mxu0 0.0
    %140 = vmatprep.subr.mxu0 0.0
    %141 = vmatpush1.msra.mxu0 0.0
    %142 = vmatprep.mubr.f32.mxu0 0.0
    %143 = vmatmul.mubr.f32.gmra.mrb[0].mxu0 %v54
    %v144 = vpop.f32.mrb[0].mxu0
    %v145 = vadd.f32 %v76, %v144
    %v146 = vpop.f32.mrb[0].mxu0
    %147 = vdwg.mxu0
    %v148 = vmul.f32 %v145, 0.01
    %v149 = vmax.f32 %v145, %v148
    %v150 = vld [vmem:[#allocation2] sm:$0xff]
    %v151 = vld [vmem:[#allocation6] sm:$0xff]
    %v152 = vld [vmem:[#allocation6 + $0x8] sm:$0xff]
    %v153 = vld [vmem:[#allocation6 + $0x10] sm:$0xff]
    %v154 = vld [vmem:[#allocation6 + $0x18] sm:$0xff]
    %v155 = vld [vmem:[#allocation6 + $0x20] sm:$0xff]
    %v156 = vld [vmem:[#allocation6 + $0x28] sm:$0xff]
    %v157 = vld [vmem:[#allocation6 + $0x30] sm:$0xff]
    %v158 = vld [vmem:[#allocation6 + $0x38] sm:$0xff]
    %v159 = vld [vmem:[#allocation6 + $0x40] sm:$0xff]
    %v160 = vld [vmem:[#allocation6 + $0x48] sm:$0xff]
    %v161 = vld [vmem:[#allocation6 + $0x50] sm:$0xff]
    %v162 = vld [vmem:[#allocation6 + $0x58] sm:$0xff]
    %v163 = vld [vmem:[#allocation6 + $0x60] sm:$0xff]
    %v164 = vld [vmem:[#allocation6 + $0x68] sm:$0xff]
    %v165 = vld [vmem:[#allocation6 + $0x70] sm:$0xff]
    %v166 = vld [vmem:[#allocation6 + $0x78] sm:$0xff]
    %167 = vmatprep.subr.mxu0 0.0
    %168 = vmatpush1.msra.mxu0 %v151
    %169 = vmatprep.subr.mxu0 0.0
    %170 = vmatpush1.msra.mxu0 %v152
    %171 = vmatprep.subr.mxu0 0.0
    %172 = vmatpush1.msra.mxu0 %v153
    %173 = vmatprep.subr.mxu0 0.0
    %174 = vmatpush1.msra.mxu0 %v154
    %175 = vmatprep.subr.mxu0 0.0
    %176 = vmatpush1.msra.mxu0 %v155
    %177 = vmatprep.subr.mxu0 0.0
    %178 = vmatpush1.msra.mxu0 %v156
    %179 = vmatprep.subr.mxu0 0.0
    %180 = vmatpush1.msra.mxu0 %v157
    %181 = vmatprep.subr.mxu0 0.0
    %182 = vmatpush1.msra.mxu0 %v158
    %183 = vmatprep.subr.mxu0 0.0
    %184 = vmatpush1.msra.mxu0 %v159
    %185 = vmatprep.subr.mxu0 0.0
    %186 = vmatpush1.msra.mxu0 %v160
    %187 = vmatprep.subr.mxu0 0.0
    %188 = vmatpush1.msra.mxu0 %v161
    %189 = vmatprep.subr.mxu0 0.0
    %190 = vmatpush1.msra.mxu0 %v162
    %191 = vmatprep.subr.mxu0 0.0
    %192 = vmatpush1.msra.mxu0 %v163
    %193 = vmatprep.subr.mxu0 0.0
    %194 = vmatpush1.msra.mxu0 %v164
    %195 = vmatprep.subr.mxu0 0.0
    %196 = vmatpush1.msra.mxu0 %v165
    %197 = vmatprep.subr.mxu0 0.0
    %198 = vmatpush1.msra.mxu0 %v166
    %199 = vmatprep.subr.mxu0 0.0
    %200 = vmatpush1.msra.mxu0 0.0
    %201 = vmatprep.subr.mxu0 0.0
    %202 = vmatpush1.msra.mxu0 0.0
    %203 = vmatprep.subr.mxu0 0.0
    %204 = vmatpush1.msra.mxu0 0.0
    %205 = vmatprep.subr.mxu0 0.0
    %206 = vmatpush1.msra.mxu0 0.0
    %207 = vmatprep.subr.mxu0 0.0
    %208 = vmatpush1.msra.mxu0 0.0
    %209 = vmatprep.subr.mxu0 0.0
    %210 = vmatpush1.msra.mxu0 0.0
    %211 = vmatprep.subr.mxu0 0.0
    %212 = vmatpush1.msra.mxu0 0.0
    %213 = vmatprep.subr.mxu0 0.0
    %214 = vmatpush1.msra.mxu0 0.0
    %215 = vmatprep.subr.mxu0 0.0
    %216 = vmatpush1.msra.mxu0 0.0
    %217 = vmatprep.subr.mxu0 0.0
    %218 = vmatpush1.msra.mxu0 0.0
    %219 = vmatprep.subr.mxu0 0.0
    %220 = vmatpush1.msra.mxu0 0.0
    %221 = vmatprep.subr.mxu0 0.0
    %222 = vmatpush1.msra.mxu0 0.0
    %223 = vmatprep.subr.mxu0 0.0
    %224 = vmatpush1.msra.mxu0 0.0
    %225 = vmatprep.subr.mxu0 0.0
    %226 = vmatpush1.msra.mxu0 0.0
    %227 = vmatprep.subr.mxu0 0.0
    %228 = vmatpush1.msra.mxu0 0.0
    %229 = vmatprep.subr.mxu0 0.0
    %230 = vmatpush1.msra.mxu0 0.0
    %231 = vmatprep.mubr.f32.mxu0 0.0
    %232 = vmatmul.mubr.f32.gmra.mrb[0].mxu0 %v149
    %v233 = vpop.f32.mrb[0].mxu0
    %v234 = vadd.f32 0.0, %v233
    %v235 = vpop.f32.mrb[0].mxu0
    %236 = vdwg.mxu0
    %v237 = vadd.f32 %v150, %v234
    %238 = vst [vmem:[#allocation2] sm:$0xff] %v237
    // Predicated region
    $region34: #{_mlp_forward.1} parent=1 // pred_check
      %p239 = pneg %p49
    $region35: #{_mlp_forward.1} parent=1 // pred_check_branch
      %241 = sbr.rel (%p239) target = $region37
    $region36: #{_mlp_forward.1} parent=1 // pred_region
      %v242 = vld [vmem:[#allocation2] sm:$0xff]
      %v243 = vld [vmem:[%s4] sm:$0x1]
      %v245 = vlaneseq
      %v246 = vshrl.u32 %v245, 7
      %v247 = vsub.s32 0, %v246
      %v248 = vrot.slane %v243, %v247
      %v250 = vadd.f32 %v242, %v248
      %251 = vst [vmem:[#allocation8] sm:$0xff] %v250
    $region37: #{_mlp_forward.1} parent=1 // pred_fallthru
      _
    // Predicated region
    $region38: #{_mlp_forward.1} parent=1 // pred_check
      _
    $region39: #{_mlp_forward.1} parent=1 // pred_check_branch
      %253 = sbr.rel (0) target = $region41
    $region40: #{_mlp_forward.1} parent=1 // pred_region
      %s255 = ssub.s32 128, 128
      %256 = vsyncadd [#allocation5], %s255
      %s258 = sshll.u32 [#allocation8], 4
      %s259 = int_to_ptr.vmem [resolvable:$true] %s258
      %261 = dma.vmem_to_hbm [thread:$0]  %s259, 128, %s5, [#allocation5]
    $region41: #{_mlp_forward.1} parent=1 // pred_fallthru
      _
    // Predicated region
    $region42: #{_mlp_forward.1} parent=1 // pred_check
      _
    $region43: #{_mlp_forward.1} parent=1 // pred_check_branch
      %263 = sbr.rel (0) target = $region45
    $region44: #{_mlp_forward.1} parent=1 // pred_region
      %264 = dma.done [#allocation5], 128
    $region45: #{_mlp_forward.1} parent=1 // pred_fallthru
      _
    %265 = vsyncpa [#allocation4], 1
    %266 = vsyncpa [#allocation7], 1
    %267 = vsyncpa [#allocation5], 1

</llo_original>
